<compile_context>
chip_gen: v7x
topology: tpu7x:2x2x1
jax: 0.10.0
libtpu: 0.0.40
codegen_flags: <defaults>
</compile_context>

<pallas_src>
import jax
import jax.numpy as jnp
from jax.experimental import pallas as pl
from jax.experimental.pallas import tpu as pltpu


def _round_up(x, m):
    return ((x + m - 1) // m) * m


def _cdiv(a, b):
    return (a + b - 1) // b


def _normalize_kernel(const_ref, img_ref, out_ref):
    # const_ref: (block_rows, 2) float32 -- column 0 = per-row mean, column 1 = per-row 1/std.
    # img_ref / out_ref: (block_rows, block_cols) lane-dense tiles.
    mean = const_ref[:, 0:1]
    inv_std = const_ref[:, 1:2]
    x = img_ref[...].astype(jnp.float32)
    out_ref[...] = ((x - mean) * inv_std).astype(out_ref.dtype)


def normalize(img, mean, std, *, target_block_bytes=None, donate_input=False):
    """Pallas implementation of `(img - mean) / std` (NCHW img, per-channel
    mean/std of shape (C, 1, 1) or (C,))."""
    N, C, H, W = img.shape
    R = N * C          # one row per (batch, channel) pair
    L = H * W          # lane-dense last dimension
    itemsize = jnp.dtype(img.dtype).itemsize

    # ---- Generation-aware VMEM budget (v7x has only 64 MiB). -----------------
    try:
        vmem_cap = int(pltpu.get_tpu_info().vmem_capacity_bytes)
    except Exception:
        vmem_cap = 64 * 1024 * 1024      # conservative fallback
    if target_block_bytes is None:
        # 128 MiB VMEM (v5e/v6e) -> 8 MiB blocks; 64 MiB (v7x) -> 4 MiB blocks.
        target_block_bytes = max(2 * 1024 * 1024,
                                 min(8 * 1024 * 1024, vmem_cap // 16))
    # Double-buffered input + output ~= 4x block, plus constants/slack.
    vmem_limit = int(min(vmem_cap // 2,
                         max(32 * 1024 * 1024, 6 * target_block_bytes)))

    # ---- Tile shape: rows first; tile columns (multiples of 128 lanes) only
    #      when even a minimal row group exceeds the target (huge H*W). --------
    sub = max(8, 32 // itemsize)         # dtype-aware sublane packing: f32->8, bf16->16, i8->32
    row_bytes = L * itemsize
    if L <= 128 or sub * row_bytes <= target_block_bytes:
        block_cols = L
        rows_fit = max(1, target_block_bytes // row_bytes)
        if rows_fit >= R:
            block_rows = R                                   # full dim -> always legal
        else:
            block_rows = min(R, max(sub, (rows_fit // sub) * sub))
    else:
        block_rows = min(R, sub)
        cols_fit = max(128, (target_block_bytes // (block_rows * itemsize) // 128) * 128)
        block_cols = min(L, cols_fit)

    n_r, n_c = _cdiv(R, block_rows), _cdiv(L, block_cols)
    if n_r * n_c == 1:
        # A 1-step grid pins all work on one TensorCore (v7x has 2 per chip) and
        # forfeits DMA/compute pipelining; split cheaply when legally possible.
        if L >= 2 * 128:
            block_cols = _round_up(_cdiv(L, 2), 128)
        elif R >= 2 * 8:
            block_rows = _round_up(_cdiv(R, 2), 8)
        n_r, n_c = _cdiv(R, block_rows), _cdiv(L, block_cols)
    grid = (n_r, n_c)

    # ---- Per-row constants merged into one (R_pad, 2) float32 table. The f32
    #      reciprocal keeps bf16 inputs accurate vs the reference division. ----
    mean_c = jnp.asarray(mean, dtype=jnp.float32).reshape(C)
    inv_c = 1.0 / jnp.asarray(std, dtype=jnp.float32).reshape(C)
    const = jnp.stack([jnp.tile(mean_c, N), jnp.tile(inv_c, N)], axis=1)   # (R, 2)
    r_pad = n_r * block_rows
    if r_pad > R:
        const = jnp.pad(const, ((0, r_pad - R), (0, 0)))     # padded rows never written back

    img2d = img.reshape(R, L)

    flops = 2 * img.size
    bytes_accessed = 2 * R * L * itemsize + const.size * 4

    out2d = pl.pallas_call(
        _normalize_kernel,
        out_shape=jax.ShapeDtypeStruct((R, L), img.dtype),
        grid_spec=pltpu.PrefetchScalarGridSpec(
            num_scalar_prefetch=0,
            grid=grid,
            in_specs=[
                pl.BlockSpec((block_rows, 2), lambda i, j: (i, 0)),           # mean | 1/std
                pl.BlockSpec((block_rows, block_cols), lambda i, j: (i, j)),  # image tile
            ],
            out_specs=pl.BlockSpec((block_rows, block_cols), lambda i, j: (i, j)),
        ),
        compiler_params=pltpu.CompilerParams(
            dimension_semantics=("parallel", "parallel"),
            vmem_limit_bytes=vmem_limit,
        ),
        cost_estimate=pl.CostEstimate(
            flops=flops, transcendentals=0, bytes_accessed=bytes_accessed),
        input_output_aliases=({1: 0} if donate_input else {}),
    )(const, img2d)

    return out2d.reshape(N, C, H, W)


if __name__ == "__main__":
    key = jax.random.PRNGKey(0)
    k_img, k_mean, k_std = jax.random.split(key, 3)

    N, C, H, W = 2, 4, 16, 16
    img = jax.random.normal(k_img, (N, C, H, W), dtype=jnp.float32)
    # Per-channel stats shaped (C, 1, 1) like the module's buffers.
    mean = jax.random.normal(k_mean, (C,), dtype=jnp.float32).reshape(C, 1, 1)
    std = (jax.random.uniform(k_std, (C,), dtype=jnp.float32) + 0.5).reshape(C, 1, 1)

    out = normalize(img, mean, std)
    out = jax.block_until_ready(out)

    # Correctness check against the plain-JAX reference of the PyTorch forward.
    ref = (img - mean[None, ...]) / std[None, ...]
    assert jnp.allclose(out, ref, atol=1e-5, rtol=1e-5), "mismatch vs reference"

    print("KERNEL_OK")
</pallas_src>

<mosaic_0001>
module attributes {stable_mosaic.version = 11 : i64} {
  func.func @_normalize_kernel(%arg0: i32, %arg1: i32, %arg2: memref<8x2xf32, #tpu.memory_space<vmem>>, %arg3: memref<8x128xf32, #tpu.memory_space<vmem>>, %arg4: memref<8x128xf32, #tpu.memory_space<vmem>>) attributes {dimension_semantics = [#tpu.dimension_semantics<parallel>, #tpu.dimension_semantics<parallel>], iteration_bounds = array<i64: 1, 2>, scalar_prefetch = 0 : i64, scratch_operands = 0 : i64, tpu.core_type = #tpu.core_type<tc>, window_params = [{transform_indices = @transform_0, window_bounds = array<i64: 8, 2>}, {transform_indices = @transform_1, window_bounds = array<i64: 8, 128>}, {transform_indices = @transform_2, window_bounds = array<i64: 8, 128>}]} {
    %c0 = arith.constant 0 : index
    %c0_0 = arith.constant 0 : index
    %0 = vector.load %arg2[%c0, %c0_0] : memref<8x2xf32, #tpu.memory_space<vmem>>, vector<8x1xf32>
    %c0_1 = arith.constant 0 : index
    %c1 = arith.constant 1 : index
    %1 = vector.load %arg2[%c0_1, %c1] : memref<8x2xf32, #tpu.memory_space<vmem>>, vector<8x1xf32>
    %c0_2 = arith.constant 0 : index
    %c0_3 = arith.constant 0 : index
    %2 = vector.load %arg3[%c0_2, %c0_3] : memref<8x128xf32, #tpu.memory_space<vmem>>, vector<8x128xf32>
    %3 = vector.broadcast %0 : vector<8x1xf32> to vector<8x128xf32>
    %4 = arith.subf %2, %3 : vector<8x128xf32>
    %5 = vector.broadcast %1 : vector<8x1xf32> to vector<8x128xf32>
    %6 = arith.mulf %4, %5 : vector<8x128xf32>
    %c0_4 = arith.constant 0 : index
    %c0_5 = arith.constant 0 : index
    %7 = vector.load %arg4[%c0_4, %c0_5] : memref<8x128xf32, #tpu.memory_space<vmem>>, vector<8x128xf32>
    tpu.vector_store %arg4[%c0_4, %c0_5], %6 {strides = array<i32>} : memref<8x128xf32, #tpu.memory_space<vmem>>, vector<8x128xf32>,
    return
  }
  func.func @transform_0(%arg0: i32, %arg1: i32) -> (i32, i32) {
    %c0_i32 = arith.constant 0 : i32
    %c0_i32_0 = arith.constant 0 : i32
    return %arg0, %c0_i32 : i32, i32
  }
  func.func @transform_1(%arg0: i32, %arg1: i32) -> (i32, i32) {
    %c0_i32 = arith.constant 0 : i32
    return %arg0, %arg1 : i32, i32
  }
  func.func @transform_2(%arg0: i32, %arg1: i32) -> (i32, i32) {
    %c0_i32 = arith.constant 0 : i32
    return %arg0, %arg1 : i32, i32
  }
}

</mosaic_0001>

<llo_original>
// kernel: tpu_custom_call.1
$region0: #{tpu_custom_call.1}
  #allocation0 [shape = 'u32[]', space=smem, size = 0x4, offset = 0x4, fixed_abs, tag = 'smem constant byte address 0x4 - core index']
  #allocation1 [shape = 'u32[144,128]{1,0:T(1,128)}', space=vmem, size = 0x12000, scoped, tag = 'internal scratch']
  %s0 = inlined_call_operand.vmem [shape: f32[8,2], index: 0, kind: input, shape index: {}]
  %s1 = inlined_call_operand.hbm [shape: f32[8,256], index: 1, kind: input, shape index: {}]
  %s2 = inlined_call_operand.hbm [shape: f32[8,256], index: 2, kind: output, shape index: {}]
  %s3 = sld [smem:[#allocation0]]
  $region45: #{tpu_custom_call.1} parent=0
    _
  %s5 = ssub.s32 1, %s3
  %s6 = scalar_select 0, %s5, %s3
  $region1: #{tpu_custom_call.1} parent=0
    #allocation2 [shape = 'u8[8192]{0}', space=vmem, size = 0x2000, scoped, tag = 'input window, operand 1']
    #allocation3 [shape = 's32[2]{0}', space=sflag, size = 0x8, scoped, tag = 'scoped memory for tpu_custom_call.1']
    #allocation4 [shape = 's32[2]{0}', space=sflag, size = 0x8, scoped, tag = 'scoped memory for tpu_custom_call.1']
    #allocation5 [shape = 'u8[8192]{0}', space=vmem, size = 0x2000, scoped, tag = 'output window, operand 0']
    %7 = vsyncpa [#allocation3], 0
    %s8 = scalar_lea.sflag [#allocation3], 1
    %9 = vsyncpa %s8, 0
    %10 = vsyncpa [#allocation4], 0
    %s11 = scalar_lea.sflag [#allocation4], 1
    %12 = vsyncpa %s11, 0
    loop: start=0, step=1, limit=4
    $region2: #{tpu_custom_call.1} parent=1 // loop_pre_header
      _
    $region3: #{tpu_custom_call.1} parent=1 // loop_header
      %s14 = sphi 0, %s18
      %p15 = scmp.ge.s32.totalorder %s14, 4
      %s21 = sphi 0, %s33
      %s22 = sphi 0, %s29
      %s23 = sphi 0, %s21
      %s24 = sphi 0, %s22
      %s25 = sphi 0, %s23
      %s26 = sphi 0, %s24
      %s36 = sphi 0, %s38
      %s39 = sphi 0, %s36
      %s40 = sphi 0, %s39
      %s56 = sphi 0, %s40
      %s64 = sphi 0, %s66
      %s67 = sphi 0, %s64
      %s68 = sphi 0, %s67
      %s84 = sphi 0, %s68
      %s92 = sphi 0, %s94
      %s95 = sphi 0, %s92
      %s96 = sphi 0, %s95
      %s112 = sphi 0, %s96
    $region4: #{tpu_custom_call.1} parent=1 // loop_header_branch
      %17 = sbr.rel (%p15) target = $region8
    $region5: #{tpu_custom_call.1} parent=1 // loop_body
      %s19 = ssub.s32 %s14, 1
      %s20 = ssub.s32 %s14, 2
      %s27 = sadd.s32 1, %s22
      %p28 = scmp.ge.s32.totalorder %s27, 2
      %s29 = scalar_select %p28, 0, %s27
      %s30 = sadd.s32 1, %s21
      %s31 = scalar_select %p28, %s30, %s21
      %p32 = scmp.ge.s32.totalorder %s31, 1
      %s33 = scalar_select %p32, 0, %s31
      %s34 = ssub.s32 %s21, %s33
      %p35 = scmp.eq.s32.totalorder %s34, 0
      %s37 = sadd.s32 %s36, 1
      %s38 = scalar_select %p35, %s36, %s37
      %p41 = pneg %p35
      %p42 = scmp.eq.s32.totalorder %s14, 1
      %p43 = por %p41, %p42
      %p44 = scmp.ne.s32.totalorder %s36, %s39
      %p45 = scmp.eq.s32.totalorder %s14, 0
      %p46 = por %p44, %p45
      %p47 = scmp.ne.s32.totalorder %s36, %s39
      %p48 = scmp.eq.s32.totalorder %s19, 1
      %p49 = por %p47, %p48
      %p50 = scmp.ne.s32.totalorder %s39, %s40
      %p51 = scmp.eq.s32.totalorder %s19, 0
      %p52 = por %p50, %p51
      %p53 = scmp.ne.s32.totalorder %s39, %s40
      %p54 = scmp.eq.s32.totalorder %s20, 1
      %p55 = por %p53, %p54
      %p57 = scmp.ne.s32.totalorder %s40, %s56
      %p58 = scmp.eq.s32.totalorder %s20, 0
      %p59 = por %p57, %p58
      %s60 = ssub.s32 %s21, %s33
      %s61 = ssub.s32 %s22, %s29
      %s62 = sor.u32 %s60, %s61
      %p63 = scmp.eq.s32.totalorder %s62, 0
      %s65 = sadd.s32 %s64, 1
      %s66 = scalar_select %p63, %s64, %s65
      %p69 = pneg %p63
      %p70 = scmp.eq.s32.totalorder %s14, 1
      %p71 = por %p69, %p70
      %p72 = scmp.ne.s32.totalorder %s64, %s67
      %p73 = scmp.eq.s32.totalorder %s14, 0
      %p74 = por %p72, %p73
      %p75 = scmp.ne.s32.totalorder %s64, %s67
      %p76 = scmp.eq.s32.totalorder %s19, 1
      %p77 = por %p75, %p76
      %p78 = scmp.ne.s32.totalorder %s67, %s68
      %p79 = scmp.eq.s32.totalorder %s19, 0
      %p80 = por %p78, %p79
      %p81 = scmp.ne.s32.totalorder %s67, %s68
      %p82 = scmp.eq.s32.totalorder %s20, 1
      %p83 = por %p81, %p82
      %p85 = scmp.ne.s32.totalorder %s68, %s84
      %p86 = scmp.eq.s32.totalorder %s20, 0
      %p87 = por %p85, %p86
      %s88 = ssub.s32 %s21, %s33
      %s89 = ssub.s32 %s22, %s29
      %s90 = sor.u32 %s88, %s89
      %p91 = scmp.eq.s32.totalorder %s90, 0
      %s93 = sadd.s32 %s92, 1
      %s94 = scalar_select %p91, %s92, %s93
      %p97 = pneg %p91
      %p98 = scmp.eq.s32.totalorder %s14, 1
      %p99 = por %p97, %p98
      %p100 = scmp.ne.s32.totalorder %s92, %s95
      %p101 = scmp.eq.s32.totalorder %s14, 0
      %p102 = por %p100, %p101
      %p103 = scmp.ne.s32.totalorder %s92, %s95
      %p104 = scmp.eq.s32.totalorder %s19, 1
      %p105 = por %p103, %p104
      %p106 = scmp.ne.s32.totalorder %s95, %s96
      %p107 = scmp.eq.s32.totalorder %s19, 0
      %p108 = por %p106, %p107
      %p109 = scmp.ne.s32.totalorder %s95, %s96
      %p110 = scmp.eq.s32.totalorder %s20, 1
      %p111 = por %p109, %p110
      %p113 = scmp.ne.s32.totalorder %s96, %s112
      %p114 = scmp.eq.s32.totalorder %s20, 0
      %p115 = por %p113, %p114
      %p116 = scmp.le.s32.totalorder 1, %s14
      %p117 = scmp.lt.s32.totalorder %s14, 3
      %p118 = pnand %p116, %p117
      %p119 = pneg %p118
      // Predicated region
      $region9: #{tpu_custom_call.1} parent=5 // pred_check
        _
      $region10: #{tpu_custom_call.1} parent=5 // pred_check_branch
        %121 = sbr.rel (%p118) target = $region12
      $region11: #{tpu_custom_call.1} parent=5 // pred_region
        %s122 = ssub.s32 %s14, 1
        // Predicated region
        $region13: #{tpu_custom_call.1} parent=11 // pred_check
          %p123 = pneg %p52
        $region14: #{tpu_custom_call.1} parent=11 // pred_check_branch
          %125 = sbr.rel (%p123) target = $region16
        $region15: #{tpu_custom_call.1} parent=11 // pred_region
          %p126 = scmp.lt.s32.totalorder %s23, 0
          %s127 = scalar_select %p126, %s23, 0
          %s128 = smul.addr %s127, 8
          %s129 = scalar_lea.vmem %s0, %s128
        $region16: #{tpu_custom_call.1} parent=11 // pred_fallthru
          _
      $region12: #{tpu_custom_call.1} parent=5 // pred_fallthru
        _
      %p130 = scmp.lt.s32.totalorder %s14, 2
      // Predicated region
      $region17: #{tpu_custom_call.1} parent=5 // pred_check
        %p131 = pneg %p130
      $region18: #{tpu_custom_call.1} parent=5 // pred_check_branch
        %133 = sbr.rel (%p131) target = $region20
      $region19: #{tpu_custom_call.1} parent=5 // pred_region
        // Predicated region
        $region21: #{tpu_custom_call.1} parent=19 // pred_check
          %p134 = pneg %p74
        $region22: #{tpu_custom_call.1} parent=19 // pred_check_branch
          %136 = sbr.rel (%p134) target = $region24
        $region23: #{tpu_custom_call.1} parent=19 // pred_region
          %s137 = sand.u32 %s64, 1
          %s138 = scalar_lea.sflag [#allocation3], %s137
          %s139 = sand.u32 %s64, 1
          %s140 = smul.addr %s139, 8
          %s141 = scalar_lea.vmem [#allocation2], %s140
          %s143 = ssub.s32 128, 128
          %144 = vsyncadd %s138, %s143
          %s145 = smul.addr %s21, 2
          %s146 = sadd.s32 %s22, %s145
          %s147 = smul.addr %s146, 128
          %s148 = scalar_lea.hbm %s1, %s147
          %s150 = sshll.u32 %s141, 4
          %s151 = int_to_ptr.vmem [resolvable:$true] %s150
          %153 = dma.hbm_to_vmem [thread:$0]  %s148, 128, %s151, %s138
        $region24: #{tpu_custom_call.1} parent=19 // pred_fallthru
          _
      $region20: #{tpu_custom_call.1} parent=5 // pred_fallthru
        _
      %p154 = scmp.le.s32.totalorder 1, %s14
      %p155 = scmp.lt.s32.totalorder %s14, 3
      %p156 = pnand %p154, %p155
      %p157 = pneg %p156
      // Predicated region
      $region25: #{tpu_custom_call.1} parent=5 // pred_check
        _
      $region26: #{tpu_custom_call.1} parent=5 // pred_check_branch
        %159 = sbr.rel (%p156) target = $region28
      $region27: #{tpu_custom_call.1} parent=5 // pred_region
        %s160 = ssub.s32 %s14, 1
        %s161 = sand.u32 %s67, 1
        %s162 = scalar_lea.sflag [#allocation3], %s161
        %s163 = sand.u32 %s67, 1
        %s164 = smul.addr %s163, 8
        %s165 = scalar_lea.vmem [#allocation2], %s164
        // Predicated region
        $region29: #{tpu_custom_call.1} parent=27 // pred_check
          %p166 = pneg %p80
        $region30: #{tpu_custom_call.1} parent=27 // pred_check_branch
          %168 = sbr.rel (%p166) target = $region32
        $region31: #{tpu_custom_call.1} parent=27 // pred_region
          %169 = dma.done %s162, 128
        $region32: #{tpu_custom_call.1} parent=27 // pred_fallthru
          _
        %p170 = scmp.lt.s32.totalorder %s23, 0
        %s171 = scalar_select %p170, %s23, 0
        %s172 = smul.addr %s171, 8
        %s173 = scalar_lea.vmem %s0, %s172
        %p174 = pneg %p52
        %p175 = pneg %p49
        %s176 = sand.u32 %s67, 1
        %s177 = scalar_lea.sflag [#allocation3], %s176
        %s178 = sand.u32 %s67, 1
        %s179 = smul.addr %s178, 8
        %s180 = scalar_lea.vmem [#allocation2], %s179
        %p181 = pneg %p80
        %p182 = pneg %p77
        %p183 = pneg %p108
        %p184 = pneg %p105
        %s185 = sand.u32 %s95, 1
        %s186 = scalar_lea.sflag [#allocation4], %s185
        %s187 = sand.u32 %s95, 1
        %s188 = smul.addr %s187, 8
        %s189 = scalar_lea.vmem [#allocation5], %s188
        %p190 = scmp.lt.s32.totalorder %s23, 0
        %s191 = scalar_select %p190, %s23, 0
        %s192 = smul.addr %s191, 8
        %s193 = scalar_lea.vmem %s0, %s192
        %v194 = vld [vmem:[%s193] sm:$0xff]
        %v195 = vld [vmem:[%s165] sm:$0xff]
        %197 = vset.pattern.permute.xlu0 0
        %198 = vperm.xlu0 %197, %v194
        %v199 = vpop.permute.xlu0 %198
        %v201 = vsub.f32 %v195, %v199
        %202 = vset.pattern.permute.xlu0 1
        %203 = vperm.xlu0 %202, %v194
        %v204 = vpop.permute.xlu0 %203
        %v206 = vmul.f32 %v201, %v204
        %207 = vst [vmem:[%s189] sm:$0xff] %v206
        %s208 = sand.u32 %s95, 1
        %s209 = scalar_lea.sflag [#allocation4], %s208
        %s210 = sand.u32 %s95, 1
        %s211 = smul.addr %s210, 8
        %s212 = scalar_lea.vmem [#allocation5], %s211
        // Predicated region
        $region33: #{tpu_custom_call.1} parent=27 // pred_check
          %p213 = pneg %p105
        $region34: #{tpu_custom_call.1} parent=27 // pred_check_branch
          %215 = sbr.rel (%p213) target = $region36
        $region35: #{tpu_custom_call.1} parent=27 // pred_region
          %s217 = ssub.s32 128, 128
          %218 = vsyncadd %s209, %s217
          %s219 = smul.addr %s23, 2
          %s220 = sadd.s32 %s24, %s219
          %s221 = smul.addr %s220, 128
          %s222 = scalar_lea.hbm %s2, %s221
          %s224 = sshll.u32 %s212, 4
          %s225 = int_to_ptr.vmem [resolvable:$true] %s224
          %227 = dma.vmem_to_hbm [thread:$0]  %s225, 128, %s222, %s209
        $region36: #{tpu_custom_call.1} parent=27 // pred_fallthru
          _
      $region28: #{tpu_custom_call.1} parent=5 // pred_fallthru
        _
      %p228 = scmp.le.s32.totalorder 2, %s14
      // Predicated region
      $region37: #{tpu_custom_call.1} parent=5 // pred_check
        %p229 = pneg %p228
      $region38: #{tpu_custom_call.1} parent=5 // pred_check_branch
        %231 = sbr.rel (%p229) target = $region40
      $region39: #{tpu_custom_call.1} parent=5 // pred_region
        %s232 = ssub.s32 %s14, 2
        // Predicated region
        $region41: #{tpu_custom_call.1} parent=39 // pred_check
          %p233 = pneg %p111
        $region42: #{tpu_custom_call.1} parent=39 // pred_check_branch
          %235 = sbr.rel (%p233) target = $region44
        $region43: #{tpu_custom_call.1} parent=39 // pred_region
          %s236 = sand.u32 %s96, 1
          %s237 = scalar_lea.sflag [#allocation4], %s236
          %s238 = sand.u32 %s96, 1
          %s239 = smul.addr %s238, 8
          %s240 = scalar_lea.vmem [#allocation5], %s239
          %241 = dma.done %s237, 128
        $region44: #{tpu_custom_call.1} parent=39 // pred_fallthru
          _
      $region40: #{tpu_custom_call.1} parent=5 // pred_fallthru
        _
    $region6: #{tpu_custom_call.1} parent=1 // loop_footer
      %s18 = sadd.s32 1, %s14
    $region7: #{tpu_custom_call.1} parent=1 // loop_footer_branch
      %13 = sbr.rel target = $region3
    $region8: #{tpu_custom_call.1} parent=1 // loop_exit
      _
    %242 = vsyncpa [#allocation3], 1
    %s243 = scalar_lea.sflag [#allocation3], 1
    %244 = vsyncpa %s243, 1
    %245 = vsyncpa [#allocation4], 1
    %s246 = scalar_lea.sflag [#allocation4], 1
    %247 = vsyncpa %s246, 1

</llo_original>
